<compile_context>
chip_gen: v5e
topology: v5e:2x2
jax: 0.10.0
libtpu: 0.0.40
codegen_flags: <defaults>
</compile_context>

<pallas_src>
import functools
import math

import jax
import jax.numpy as jnp
from jax.experimental import pallas as pl
from jax.experimental.pallas import tpu as pltpu


# --------------------------------------------------------------------------- #
# Kernel
# --------------------------------------------------------------------------- #
def _finetuner_head_kernel(x_ref, keys_ref, den_ref, w_ref, b_ref, out_ref,
                           acc_ref):
    # x_ref:    [TB, TS, D]   (one (batch, seq) tile, native dtype)
    # keys_ref: [TB, TS, 1]   (binary mask, same dtype as x)
    # den_ref:  [TB, 1] f32   (clamped token count, finalize only)
    # w_ref:    [D, Cpad]     (whole array, resident in VMEM, native dtype)
    # b_ref:    [1, Cpad]     (whole array, resident in VMEM, native dtype)
    # out_ref:  [TB, Cpad]    (same block across the S axis -> accumulator out)
    # acc_ref:  [TB, D] f32   scratch (masked sum over S)
    s_idx = pl.program_id(1)

    @pl.when(s_idx == 0)
    def _init():
        acc_ref[...] = jnp.zeros_like(acc_ref)

    # Mask is {0,1}: the multiply is exact in the source dtype (keeps bf16
    # inputs on the bf16 VALU path / halves vreg footprint); only the
    # reduction accumulates in f32.
    masked = x_ref[...] * keys_ref[...]                       # [TB, TS, D]
    acc_ref[...] += jnp.sum(masked, axis=1, dtype=jnp.float32)

    @pl.when(s_idx == pl.num_programs(1) - 1)
    def _finalize():
        pooled = acc_ref[...] / den_ref[...]                  # [TB, D] f32
        w = w_ref[...]
        if w.dtype != jnp.float32:
            pooled = pooled.astype(w.dtype)                   # MXU-native matmul
        logits = jnp.dot(pooled, w, preferred_element_type=jnp.float32)
        logits = logits + b_ref[...].astype(jnp.float32)
        out_ref[...] = logits.astype(out_ref.dtype)           # full-lane store


# --------------------------------------------------------------------------- #
# Tile / VMEM policy (generation-aware)
# --------------------------------------------------------------------------- #
def _vmem_capacity_bytes():
    try:
        return int(pltpu.get_tpu_info().vmem_capacity_bytes)
    except Exception:
        return 64 * 1024 * 1024  # conservative fallback (v7x-sized)


def _largest_aligned_divisor(n, cap, align=8):
    """Largest divisor of n that is <= cap and a multiple of `align`; else n."""
    cap = max(1, min(n, cap))
    for t in range(cap, 0, -1):
        if n % t == 0 and t % align == 0:
            return t
    return n  # full axis is always a legal block shape


def _select_tiles(B, S, D, itemsize, vmem_cap, tb, ts):
    # Budget the double-buffered x stream to ~42% of physical VMEM
    # (~54 MiB on v5e/v6e, ~27 MiB on v7x).
    x_budget = int(0.42 * vmem_cap)

    # ---- tb: fill MXU rows / amortize the ~0.35us per-grid-step overhead, but
    #      keep >= 2 B-blocks when B allows so the "parallel" axis actually
    #      splits across v7x's two TensorCores.
    if tb is None:
        tb_cap = 256
        if B >= 16:
            tb_cap = min(tb_cap, B // 2)
        # don't let tb alone blow the x budget even at the minimum ts
        min_ts = min(S, 8)
        tb_by_budget = max(1, x_budget // max(1, 2 * min_ts * D * itemsize))
        if tb_by_budget >= 8:
            tb_cap = min(tb_cap, tb_by_budget)
        tb = _largest_aligned_divisor(B, tb_cap)
    else:
        tb = int(min(tb, B))
        if tb != B and (B % tb != 0 or tb % 8 != 0):
            tb = _largest_aligned_divisor(B, tb)

    # ---- ts: largest 8-aligned tile that fits the budget; pad S up to a
    #      multiple of it (padded rows carry mask 0 -> result unchanged).
    if ts is None:
        ts_max = max(8, x_budget // max(1, 2 * tb * D * itemsize))
        ts = min(S, 1024, ts_max)
        ts = max(8, (ts // 8) * 8)
    else:
        ts = int(ts)
        if ts < S:
            ts = max(8, (min(ts, S) // 8) * 8)
    if ts >= S:
        ts = S
        s_pad = S
    else:
        s_pad = ((S + ts - 1) // ts) * ts
    return tb, ts, s_pad


# --------------------------------------------------------------------------- #
# Wrapper
# --------------------------------------------------------------------------- #
@functools.partial(jax.jit, static_argnames=("tb", "ts"))
def finetuner_classification(x, keys, w, b, *, tb=None, ts=None):
    """x: [B,S,D], keys: [B,S], w: [D,C], b: [1,C] -> logits [B,C] (float32)."""
    B, S, D = x.shape
    C = w.shape[1]
    itemsize = x.dtype.itemsize
    w_item = w.dtype.itemsize

    vmem_cap = _vmem_capacity_bytes()
    tb, ts, s_pad = _select_tiles(B, S, D, itemsize, vmem_cap, tb, ts)

    # ---- pad the class dimension to a full lane width (128) -----------------
    c_pad = max(128, ((C + 127) // 128) * 128)
    w_p = jnp.pad(w, ((0, 0), (0, c_pad - C)))          # native dtype, no f32 copy
    b_p = jnp.pad(b, ((0, 0), (0, c_pad - C)))

    # ---- mask as [B, S, 1] in x's dtype; pad S with mask-0 rows --------------
    keys3 = keys.astype(x.dtype).reshape(B, S, 1)
    if s_pad != S:
        x = jnp.pad(x, ((0, 0), (0, s_pad - S), (0, 0)))
        keys3 = jnp.pad(keys3, ((0, 0), (0, s_pad - S), (0, 0)))

    # Denominator computed once in the wrapper (removes a per-step reduction
    # and one scratch buffer from the inner loop).
    den = jnp.maximum(jnp.sum(keys.astype(jnp.float32), axis=1, keepdims=True),
                      1.0)                                           # [B, 1] f32

    grid = (B // tb, s_pad // ts)

    # ---- VMEM accounting: double-buffered streams + single-copy W/b ----------
    x_bytes = 2 * tb * ts * D * itemsize
    k_bytes = 2 * tb * ts * itemsize
    den_bytes = 2 * tb * 4
    w_bytes = D * c_pad * w_item          # single resident copy (not pipelined)
    bias_bytes = c_pad * w_item
    out_bytes = 2 * tb * c_pad * 4
    acc_bytes = tb * D * 4
    vmem_need = (x_bytes + k_bytes + den_bytes + w_bytes + bias_bytes
                 + out_bytes + acc_bytes)
    vmem_limit = int(min(0.85 * vmem_cap,
                         max(1.25 * vmem_need, 32 * 1024 * 1024)))

    # Advisory cost so XLA schedules neighbours around this HBM-bound call.
    cost = pl.CostEstimate(
        flops=2 * B * s_pad * D + 2 * B * D * c_pad,
        transcendentals=0,
        bytes_accessed=(B * s_pad * D * itemsize + B * s_pad * itemsize
                        + D * c_pad * w_item + c_pad * w_item
                        + B * 4 + B * c_pad * 4),
    )

    out_padded = pl.pallas_call(
        _finetuner_head_kernel,
        out_shape=jax.ShapeDtypeStruct((B, c_pad), jnp.float32),
        grid_spec=pltpu.PrefetchScalarGridSpec(
            num_scalar_prefetch=0,
            grid=grid,
            in_specs=[
                pl.BlockSpec((tb, ts, D), lambda bi, si: (bi, si, 0)),
                pl.BlockSpec((tb, ts, 1), lambda bi, si: (bi, si, 0)),
                pl.BlockSpec((tb, 1), lambda bi, si: (bi, 0)),
                # Constant operands: whole array, one resident VMEM copy
                # (no double-buffering of W / b).
                pl.BlockSpec(memory_space=pltpu.MemorySpace.VMEM),
                pl.BlockSpec(memory_space=pltpu.MemorySpace.VMEM),
            ],
            out_specs=pl.BlockSpec((tb, c_pad), lambda bi, si: (bi, 0)),
            scratch_shapes=[
                pltpu.VMEM((tb, D), jnp.float32),
            ],
        ),
        compiler_params=pltpu.CompilerParams(
            dimension_semantics=("parallel", "arbitrary"),
            vmem_limit_bytes=vmem_limit,
        ),
        cost_estimate=cost,
    )(x, keys3, den, w_p, b_p)

    return out_padded[:, :C]


# --------------------------------------------------------------------------- #
# Reference (pure JAX)
# --------------------------------------------------------------------------- #
def _reference(x, keys, w, b):
    m = keys.astype(jnp.float32)
    pooled = (x.astype(jnp.float32) * m[:, :, None]).sum(axis=1) / jnp.maximum(
        m.sum(axis=1, keepdims=True), 1.0)
    return pooled @ w.astype(jnp.float32) + b.astype(jnp.float32)


# --------------------------------------------------------------------------- #
# Demo / self-test
# --------------------------------------------------------------------------- #
if __name__ == "__main__":
    # Small shapes consistent with the module's forward:
    #   batch=2, seq=20, hidden(in_features)=32, num_classes=4
    # seq=20 with ts=8 exercises the S-reduction accumulator across 3 tiles
    # AND the mask-0 sequence padding path (20 -> 24).
    B, S, D, C = 2, 20, 32, 4

    key = jax.random.PRNGKey(0)
    kx, kw, kb = jax.random.split(key, 3)

    x = jax.random.normal(kx, (B, S, D), dtype=jnp.float32)
    # keys: binary validity mask (last three positions of batch 1 padded)
    keys = jnp.ones((B, S), dtype=jnp.float32)
    keys = keys.at[1, -3:].set(0.0)

    # Deterministic head parameters (nn.Linear(D, C) equivalent, W stored as [D, C])
    bound = 1.0 / math.sqrt(D)
    w = jax.random.uniform(kw, (D, C), minval=-bound, maxval=bound,
                           dtype=jnp.float32)
    b = jax.random.uniform(kb, (1, C), minval=-bound, maxval=bound,
                           dtype=jnp.float32)

    out = finetuner_classification(x, keys, w, b, ts=8)
    out = jax.block_until_ready(out)

    ref = _reference(x, keys, w, b)
    assert out.shape == (B, C)
    assert jnp.allclose(out, ref, atol=1e-5, rtol=1e-5), "mismatch vs reference"

    print("KERNEL_OK")
</pallas_src>

<mosaic_0001>
module attributes {stable_mosaic.version = 11 : i64} {
  func.func @_finetuner_head_kernel(%arg0: i32, %arg1: i32, %arg2: memref<2x8x32xf32, #tpu.memory_space<vmem>>, %arg3: memref<2x8x1xf32, #tpu.memory_space<vmem>>, %arg4: memref<2x1xf32, #tpu.memory_space<vmem>>, %arg5: memref<32x128xf32, #tpu.memory_space<vmem>>, %arg6: memref<1x128xf32, #tpu.memory_space<vmem>>, %arg7: memref<2x128xf32, #tpu.memory_space<vmem>>, %arg8: memref<2x32xf32, #tpu.memory_space<vmem>>) attributes {dimension_semantics = [#tpu.dimension_semantics<parallel>, #tpu.dimension_semantics<arbitrary>], iteration_bounds = array<i64: 1, 3>, scalar_prefetch = 0 : i64, scratch_operands = 1 : i64, tpu.core_type = #tpu.core_type<tc>, window_params = [{transform_indices = @transform_0, window_bounds = array<i64: 2, 8, 32>}, {transform_indices = @transform_1, window_bounds = array<i64: 2, 8, 1>}, {transform_indices = @transform_2, window_bounds = array<i64: 2, 1>}, {pipeline_mode = #tpu.pipeline_mode<synchronous>, transform_indices = @transform_3, window_bounds = array<i64: 32, 128>}, {pipeline_mode = #tpu.pipeline_mode<synchronous>, transform_indices = @transform_4, window_bounds = array<i64: 1, 128>}, {transform_indices = @transform_5, window_bounds = array<i64: 2, 128>}]} {
    %c0_i32 = arith.constant 0 : i32
    %0 = arith.cmpi eq, %arg1, %c0_i32 : i32
    %1 = arith.extui %0 : i1 to i32
    %c0_i32_0 = arith.constant 0 : i32
    %2 = arith.cmpi ne, %1, %c0_i32_0 : i32
    scf.if %2 {
      %cst_11 = arith.constant 0.000000e+00 : f32
      %14 = vector.broadcast %cst_11 : f32 to vector<2x32xf32>
      %c0_12 = arith.constant 0 : index
      %c0_13 = arith.constant 0 : index
      %15 = vector.load %arg8[%c0_12, %c0_13] : memref<2x32xf32, #tpu.memory_space<vmem>>, vector<2x32xf32>
      tpu.vector_store %arg8[%c0_12, %c0_13], %14 {strides = array<i32>} : memref<2x32xf32, #tpu.memory_space<vmem>>, vector<2x32xf32>,
    } else {
    }
    %c0 = arith.constant 0 : index
    %c0_1 = arith.constant 0 : index
    %c0_2 = arith.constant 0 : index
    %3 = vector.load %arg2[%c0, %c0_1, %c0_2] : memref<2x8x32xf32, #tpu.memory_space<vmem>>, vector<2x8x32xf32>
    %c0_3 = arith.constant 0 : index
    %c0_4 = arith.constant 0 : index
    %c0_5 = arith.constant 0 : index
    %4 = vector.load %arg3[%c0_3, %c0_4, %c0_5] : memref<2x8x1xf32, #tpu.memory_space<vmem>>, vector<2x8x1xf32>
    %5 = vector.broadcast %4 : vector<2x8x1xf32> to vector<2x8x32xf32>
    %6 = arith.mulf %3, %5 : vector<2x8x32xf32>
    %c0_6 = arith.constant 0 : index
    %c0_7 = arith.constant 0 : index
    %7 = vector.load %arg8[%c0_6, %c0_7] : memref<2x32xf32, #tpu.memory_space<vmem>>, vector<2x32xf32>
    %cst = arith.constant dense<0.000000e+00> : vector<2x32xf32>
    %8 = vector.multi_reduction <add>, %6, %cst [1] : vector<2x8x32xf32> to vector<2x32xf32>
    %9 = arith.addf %7, %8 : vector<2x32xf32>
    %c0_8 = arith.constant 0 : index
    %c0_9 = arith.constant 0 : index
    %10 = vector.load %arg8[%c0_8, %c0_9] : memref<2x32xf32, #tpu.memory_space<vmem>>, vector<2x32xf32>
    tpu.vector_store %arg8[%c0_8, %c0_9], %9 {strides = array<i32>} : memref<2x32xf32, #tpu.memory_space<vmem>>, vector<2x32xf32>,
    %c2_i32 = arith.constant 2 : i32
    %11 = arith.cmpi eq, %arg1, %c2_i32 : i32
    %12 = arith.extui %11 : i1 to i32
    %c0_i32_10 = arith.constant 0 : i32
    %13 = arith.cmpi ne, %12, %c0_i32_10 : i32
    scf.if %13 {
      %c0_11 = arith.constant 0 : index
      %c0_12 = arith.constant 0 : index
      %14 = vector.load %arg8[%c0_11, %c0_12] : memref<2x32xf32, #tpu.memory_space<vmem>>, vector<2x32xf32>
      %c0_13 = arith.constant 0 : index
      %c0_14 = arith.constant 0 : index
      %15 = vector.load %arg4[%c0_13, %c0_14] : memref<2x1xf32, #tpu.memory_space<vmem>>, vector<2x1xf32>
      %16 = vector.broadcast %15 : vector<2x1xf32> to vector<2x32xf32>
      %17 = arith.divf %14, %16 : vector<2x32xf32>
      %c0_15 = arith.constant 0 : index
      %c0_16 = arith.constant 0 : index
      %18 = vector.load %arg5[%c0_15, %c0_16] : memref<32x128xf32, #tpu.memory_space<vmem>>, vector<32x128xf32>
      %cst_17 = arith.constant dense<0.000000e+00> : vector<2x128xf32>
      %19 = tpu.matmul %17, %18, %cst_17 {dimension_numbers = #tpu.dot_dimension_numbers<[1], [0], [0], [1], [0, 0, 1, 1], [], []>} : vector<2x32xf32>, vector<32x128xf32>, vector<2x128xf32> -> vector<2x128xf32>
      %c0_18 = arith.constant 0 : index
      %c0_19 = arith.constant 0 : index
      %20 = vector.load %arg6[%c0_18, %c0_19] : memref<1x128xf32, #tpu.memory_space<vmem>>, vector<1x128xf32>
      %21 = vector.broadcast %20 : vector<1x128xf32> to vector<2x128xf32>
      %22 = arith.addf %19, %21 : vector<2x128xf32>
      %c0_20 = arith.constant 0 : index
      %c0_21 = arith.constant 0 : index
      %23 = vector.load %arg7[%c0_20, %c0_21] : memref<2x128xf32, #tpu.memory_space<vmem>>, vector<2x128xf32>
      tpu.vector_store %arg7[%c0_20, %c0_21], %22 {strides = array<i32>} : memref<2x128xf32, #tpu.memory_space<vmem>>, vector<2x128xf32>,
    } else {
    }
    return
  }
  func.func @transform_0(%arg0: i32, %arg1: i32) -> (i32, i32, i32) {
    %c0_i32 = arith.constant 0 : i32
    %c0_i32_0 = arith.constant 0 : i32
    return %arg0, %arg1, %c0_i32 : i32, i32, i32
  }
  func.func @transform_1(%arg0: i32, %arg1: i32) -> (i32, i32, i32) {
    %c0_i32 = arith.constant 0 : i32
    %c0_i32_0 = arith.constant 0 : i32
    return %arg0, %arg1, %c0_i32 : i32, i32, i32
  }
  func.func @transform_2(%arg0: i32, %arg1: i32) -> (i32, i32) {
    %c0_i32 = arith.constant 0 : i32
    %c0_i32_0 = arith.constant 0 : i32
    return %arg0, %c0_i32 : i32, i32
  }
  func.func @transform_3(%arg0: i32, %arg1: i32) -> (i32, i32) {
    %c0_i32 = arith.constant 0 : i32
    %c0_i32_0 = arith.constant 0 : i32
    %c0_i32_1 = arith.constant 0 : i32
    return %c0_i32, %c0_i32_0 : i32, i32
  }
  func.func @transform_4(%arg0: i32, %arg1: i32) -> (i32, i32) {
    %c0_i32 = arith.constant 0 : i32
    %c0_i32_0 = arith.constant 0 : i32
    %c0_i32_1 = arith.constant 0 : i32
    return %c0_i32, %c0_i32_0 : i32, i32
  }
  func.func @transform_5(%arg0: i32, %arg1: i32) -> (i32, i32) {
    %c0_i32 = arith.constant 0 : i32
    %c0_i32_0 = arith.constant 0 : i32
    return %arg0, %c0_i32 : i32, i32
  }
}

</mosaic_0001>

<llo_original>
// kernel: finetuner_classification.1
$region0: #{finetuner_classification.1}
  #allocation0 [shape = 'u32[]', space=smem, size = 0x4, offset = 0x4, fixed_abs, tag = 'smem constant byte address 0x4 - core index']
  #allocation1 [shape = 'u32[72,128]{1,0:T(1,128)}', space=vmem, size = 0x9000, scoped, tag = 'internal scratch']
  #allocation2 [shape = 'f32[2,32]{1,0:T(2,128)}', space=vmem, size = 0x400, scoped, tag = 'scratch operand']
  %s0 = inlined_call_operand.vmem [shape: f32[2,24,32], index: 0, kind: input, shape index: {}]
  %s1 = inlined_call_operand.vmem [shape: f32[2,24,1], index: 1, kind: input, shape index: {}]
  %s2 = inlined_call_operand.vmem [shape: f32[2,1], index: 2, kind: input, shape index: {}]
  %s3 = inlined_call_operand.vmem [shape: f32[32,128], index: 3, kind: input, shape index: {}]
  %s4 = inlined_call_operand.vmem [shape: f32[1,128], index: 4, kind: input, shape index: {}]
  %s5 = inlined_call_operand.hbm [shape: f32[2,128], index: 5, kind: output, shape index: {}]
  %s6 = sld [smem:[#allocation0]]
  $region137: #{finetuner_classification.1} parent=0
    _
  %s8 = ssub.s32 1, %s6
  %s9 = scalar_select 0, %s8, %s6
  $region1: #{finetuner_classification.1} parent=0
    #allocation3 [shape = 'u8[16384]{0}', space=vmem, size = 0x4000, scoped, tag = 'input window, operand 0']
    #allocation4 [shape = 'u8[16384]{0}', space=vmem, size = 0x4000, scoped, tag = 'input window, operand 1']
    #allocation5 [shape = 'u8[1024]{0}', space=vmem, size = 0x400, scoped, tag = 'output window, operand 0, single buffered']
    #allocation6 [shape = 's32[2]{0}', space=sflag, size = 0x8, scoped, tag = 'scoped memory for finetuner_classification.1']
    %10 = vsyncpa [#allocation6], 0
    loop: start=0, step=1, limit=5
    $region2: #{finetuner_classification.1} parent=1 // loop_pre_header
      _
    $region3: #{finetuner_classification.1} parent=1 // loop_header
      %s12 = sphi 0, %s16
      %p13 = scmp.ge.s32.totalorder %s12, 5
      %s19 = sphi 0, %s31
      %s20 = sphi 0, %s27
      %s21 = sphi 0, %s19
      %s22 = sphi 0, %s20
      %s23 = sphi 0, %s21
      %s24 = sphi 0, %s22
      %s36 = sphi 0, %s38
      %s39 = sphi 0, %s36
      %s40 = sphi 0, %s39
      %s56 = sphi 0, %s40
      %s64 = sphi 0, %s66
      %s67 = sphi 0, %s64
      %s68 = sphi 0, %s67
      %s84 = sphi 0, %s68
      %s90 = sphi 0, %s92
      %s93 = sphi 0, %s90
      %s94 = sphi 0, %s93
      %s110 = sphi 0, %s94
      %s114 = sphi 0, %s114
      %s116 = sphi 0, %s114
      %s117 = sphi 0, %s116
      %s131 = sphi 0, %s117
      %s135 = sphi 0, %s135
      %s137 = sphi 0, %s135
      %s138 = sphi 0, %s137
      %s152 = sphi 0, %s138
      %s158 = sphi 0, %s160
      %s161 = sphi 0, %s158
      %s162 = sphi 0, %s161
      %s178 = sphi 0, %s162
    $region4: #{finetuner_classification.1} parent=1 // loop_header_branch
      %15 = sbr.rel (%p13) target = $region8
    $region5: #{finetuner_classification.1} parent=1 // loop_body
      %s17 = ssub.s32 %s12, 1
      %s18 = ssub.s32 %s12, 2
      %s25 = sadd.s32 1, %s20
      %p26 = scmp.ge.s32.totalorder %s25, 3
      %s27 = scalar_select %p26, 0, %s25
      %s28 = sadd.s32 1, %s19
      %s29 = scalar_select %p26, %s28, %s19
      %p30 = scmp.ge.s32.totalorder %s29, 1
      %s31 = scalar_select %p30, 0, %s29
      %s32 = ssub.s32 %s19, %s31
      %s33 = ssub.s32 %s20, %s27
      %s34 = sor.u32 %s32, %s33
      %p35 = scmp.eq.s32.totalorder %s34, 0
      %s37 = sadd.s32 %s36, 1
      %s38 = scalar_select %p35, %s36, %s37
      %p41 = pneg %p35
      %p42 = scmp.eq.s32.totalorder %s12, 2
      %p43 = por %p41, %p42
      %p44 = scmp.ne.s32.totalorder %s36, %s39
      %p45 = scmp.eq.s32.totalorder %s12, 0
      %p46 = por %p44, %p45
      %p47 = scmp.ne.s32.totalorder %s36, %s39
      %p48 = scmp.eq.s32.totalorder %s17, 2
      %p49 = por %p47, %p48
      %p50 = scmp.ne.s32.totalorder %s39, %s40
      %p51 = scmp.eq.s32.totalorder %s17, 0
      %p52 = por %p50, %p51
      %p53 = scmp.ne.s32.totalorder %s39, %s40
      %p54 = scmp.eq.s32.totalorder %s18, 2
      %p55 = por %p53, %p54
      %p57 = scmp.ne.s32.totalorder %s40, %s56
      %p58 = scmp.eq.s32.totalorder %s18, 0
      %p59 = por %p57, %p58
      %s60 = ssub.s32 %s19, %s31
      %s61 = ssub.s32 %s20, %s27
      %s62 = sor.u32 %s60, %s61
      %p63 = scmp.eq.s32.totalorder %s62, 0
      %s65 = sadd.s32 %s64, 1
      %s66 = scalar_select %p63, %s64, %s65
      %p69 = pneg %p63
      %p70 = scmp.eq.s32.totalorder %s12, 2
      %p71 = por %p69, %p70
      %p72 = scmp.ne.s32.totalorder %s64, %s67
      %p73 = scmp.eq.s32.totalorder %s12, 0
      %p74 = por %p72, %p73
      %p75 = scmp.ne.s32.totalorder %s64, %s67
      %p76 = scmp.eq.s32.totalorder %s17, 2
      %p77 = por %p75, %p76
      %p78 = scmp.ne.s32.totalorder %s67, %s68
      %p79 = scmp.eq.s32.totalorder %s17, 0
      %p80 = por %p78, %p79
      %p81 = scmp.ne.s32.totalorder %s67, %s68
      %p82 = scmp.eq.s32.totalorder %s18, 2
      %p83 = por %p81, %p82
      %p85 = scmp.ne.s32.totalorder %s68, %s84
      %p86 = scmp.eq.s32.totalorder %s18, 0
      %p87 = por %p85, %p86
      %s88 = ssub.s32 %s19, %s31
      %p89 = scmp.eq.s32.totalorder %s88, 0
      %s91 = sadd.s32 %s90, 1
      %s92 = scalar_select %p89, %s90, %s91
      %p95 = pneg %p89
      %p96 = scmp.eq.s32.totalorder %s12, 2
      %p97 = por %p95, %p96
      %p98 = scmp.ne.s32.totalorder %s90, %s93
      %p99 = scmp.eq.s32.totalorder %s12, 0
      %p100 = por %p98, %p99
      %p101 = scmp.ne.s32.totalorder %s90, %s93
      %p102 = scmp.eq.s32.totalorder %s17, 2
      %p103 = por %p101, %p102
      %p104 = scmp.ne.s32.totalorder %s93, %s94
      %p105 = scmp.eq.s32.totalorder %s17, 0
      %p106 = por %p104, %p105
      %p107 = scmp.ne.s32.totalorder %s93, %s94
      %p108 = scmp.eq.s32.totalorder %s18, 2
      %p109 = por %p107, %p108
      %p111 = scmp.ne.s32.totalorder %s94, %s110
      %p112 = scmp.eq.s32.totalorder %s18, 0
      %p113 = por %p111, %p112
      %s115 = sadd.s32 %s114, 1
      %p118 = scmp.eq.s32.totalorder %s12, 2
      %p119 = scmp.ne.s32.totalorder %s114, %s116
      %p120 = scmp.eq.s32.totalorder %s12, 0
      %p121 = por %p119, %p120
      %p122 = scmp.ne.s32.totalorder %s114, %s116
      %p123 = scmp.eq.s32.totalorder %s17, 2
      %p124 = por %p122, %p123
      %p125 = scmp.ne.s32.totalorder %s116, %s117
      %p126 = scmp.eq.s32.totalorder %s17, 0
      %p127 = por %p125, %p126
      %p128 = scmp.ne.s32.totalorder %s116, %s117
      %p129 = scmp.eq.s32.totalorder %s18, 2
      %p130 = por %p128, %p129
      %p132 = scmp.ne.s32.totalorder %s117, %s131
      %p133 = scmp.eq.s32.totalorder %s18, 0
      %p134 = por %p132, %p133
      %s136 = sadd.s32 %s135, 1
      %p139 = scmp.eq.s32.totalorder %s12, 2
      %p140 = scmp.ne.s32.totalorder %s135, %s137
      %p141 = scmp.eq.s32.totalorder %s12, 0
      %p142 = por %p140, %p141
      %p143 = scmp.ne.s32.totalorder %s135, %s137
      %p144 = scmp.eq.s32.totalorder %s17, 2
      %p145 = por %p143, %p144
      %p146 = scmp.ne.s32.totalorder %s137, %s138
      %p147 = scmp.eq.s32.totalorder %s17, 0
      %p148 = por %p146, %p147
      %p149 = scmp.ne.s32.totalorder %s137, %s138
      %p150 = scmp.eq.s32.totalorder %s18, 2
      %p151 = por %p149, %p150
      %p153 = scmp.ne.s32.totalorder %s138, %s152
      %p154 = scmp.eq.s32.totalorder %s18, 0
      %p155 = por %p153, %p154
      %s156 = ssub.s32 %s19, %s31
      %p157 = scmp.eq.s32.totalorder %s156, 0
      %s159 = sadd.s32 %s158, 1
      %s160 = scalar_select %p157, %s158, %s159
      %p163 = pneg %p157
      %p164 = scmp.eq.s32.totalorder %s12, 2
      %p165 = por %p163, %p164
      %p166 = scmp.ne.s32.totalorder %s158, %s161
      %p167 = scmp.eq.s32.totalorder %s12, 0
      %p168 = por %p166, %p167
      %p169 = scmp.ne.s32.totalorder %s158, %s161
      %p170 = scmp.eq.s32.totalorder %s17, 2
      %p171 = por %p169, %p170
      %p172 = scmp.ne.s32.totalorder %s161, %s162
      %p173 = scmp.eq.s32.totalorder %s17, 0
      %p174 = por %p172, %p173
      %p175 = scmp.ne.s32.totalorder %s161, %s162
      %p176 = scmp.eq.s32.totalorder %s18, 2
      %p177 = por %p175, %p176
      %p179 = scmp.ne.s32.totalorder %s162, %s178
      %p180 = scmp.eq.s32.totalorder %s18, 0
      %p181 = por %p179, %p180
      %p182 = scmp.le.s32.totalorder 1, %s12
      %p183 = scmp.lt.s32.totalorder %s12, 4
      %p184 = pnand %p182, %p183
      %p185 = pneg %p184
      // Predicated region
      $region9: #{finetuner_classification.1} parent=5 // pred_check
        _
      $region10: #{finetuner_classification.1} parent=5 // pred_check_branch
        %187 = sbr.rel (%p184) target = $region12
      $region11: #{finetuner_classification.1} parent=5 // pred_region
        %s188 = ssub.s32 %s12, 1
        // Predicated region
        $region13: #{finetuner_classification.1} parent=11 // pred_check
          %p189 = pneg %p106
        $region14: #{finetuner_classification.1} parent=11 // pred_check_branch
          %191 = sbr.rel (%p189) target = $region16
        $region15: #{finetuner_classification.1} parent=11 // pred_region
          %p192 = scmp.lt.s32.totalorder %s21, 0
          %s193 = scalar_select %p192, %s21, 0
          %s194 = smul.addr %s193, 2
          %s195 = scalar_lea.vmem %s2, %s194
        $region16: #{finetuner_classification.1} parent=11 // pred_fallthru
          _
        // Predicated region
        $region17: #{finetuner_classification.1} parent=11 // pred_check
          %p196 = pneg %p127
        $region18: #{finetuner_classification.1} parent=11 // pred_check_branch
          %198 = sbr.rel (%p196) target = $region20
        $region19: #{finetuner_classification.1} parent=11 // pred_region
          _
        $region20: #{finetuner_classification.1} parent=11 // pred_fallthru
          _
        // Predicated region
        $region21: #{finetuner_classification.1} parent=11 // pred_check
          %p199 = pneg %p148
        $region22: #{finetuner_classification.1} parent=11 // pred_check_branch
          %201 = sbr.rel (%p199) target = $region24
        $region23: #{finetuner_classification.1} parent=11 // pred_region
          _
        $region24: #{finetuner_classification.1} parent=11 // pred_fallthru
          _
      $region12: #{finetuner_classification.1} parent=5 // pred_fallthru
        _
      %p202 = scmp.lt.s32.totalorder %s12, 3
      // Predicated region
      $region25: #{finetuner_classification.1} parent=5 // pred_check
        %p203 = pneg %p202
      $region26: #{finetuner_classification.1} parent=5 // pred_check_branch
        %205 = sbr.rel (%p203) target = $region28
      $region27: #{finetuner_classification.1} parent=5 // pred_region
        // Predicated region
        $region29: #{finetuner_classification.1} parent=27 // pred_check
          %p206 = pneg %p46
        $region30: #{finetuner_classification.1} parent=27 // pred_check_branch
          %208 = sbr.rel (%p206) target = $region32
        $region31: #{finetuner_classification.1} parent=27 // pred_region
          %s209 = sand.u32 %s36, 1
          %s210 = sand.u32 %s36, 1
          %s211 = smul.addr %s210, 16
          %s212 = scalar_lea.vmem [#allocation3], %s211
          %s213 = smul.u32 2, %s19
          %s214 = smul.addr %s213, 3
          %s215 = sadd.s32 %s20, %s214
          %s216 = smul.addr %s215, 8
          %s217 = scalar_lea.vmem %s0, %s216
          // Predicated region
          $region33: #{finetuner_classification.1} parent=31 // pred_check
            _
          $region34: #{finetuner_classification.1} parent=31 // pred_check_branch
            %219 = sbr.rel (0) target = $region36
          $region35: #{finetuner_classification.1} parent=31 // pred_region
            // Predicated region
            $region37: #{finetuner_classification.1} parent=35 // pred_check
              _
            $region38: #{finetuner_classification.1} parent=35 // pred_check_branch
              %221 = sbr.rel (0) target = $region40
            $region39: #{finetuner_classification.1} parent=35 // pred_region
              // Predicated region
              $region52: #{finetuner_classification.1} parent=39 // pred_check
                _
              $region53: #{finetuner_classification.1} parent=39 // pred_check_branch
                %239 = sbr.rel (0) target = $region55
              $region54: #{finetuner_classification.1} parent=39 // pred_region
                loop: start=0, step=1, limit=1
                $region56: #{finetuner_classification.1} parent=54 // loop_pre_header
                  _
                $region57: #{finetuner_classification.1} parent=54 // loop_header
                  %s241 = sphi 0, %s245
                  %p242 = scmp.ge.s32.totalorder %s241, 1
                  %s246 = sphi %s217, %s217
                  %s247 = sphi %s212, %s212
                $region58: #{finetuner_classification.1} parent=54 // loop_header_branch
                  %244 = sbr.rel (%p242) target = $region62
                $region59: #{finetuner_classification.1} parent=54 // loop_body
                  %v248 = vld [vmem:[%s246] sm:$0xff]
                  %249 = vst [vmem:[%s247] sm:$0xff] %v248
                  %v250 = vld [vmem:[%s246 + $0x18] sm:$0xff]
                  %251 = vst [vmem:[%s247 + $0x8] sm:$0xff] %v250
                $region60: #{finetuner_classification.1} parent=54 // loop_footer
                  %s245 = sadd.s32 1, %s241
                $region61: #{finetuner_classification.1} parent=54 // loop_footer_branch
                  %240 = sbr.rel target = $region57
                $region62: #{finetuner_classification.1} parent=54 // loop_exit
                  _
              $region55: #{finetuner_classification.1} parent=39 // pred_fallthru
                _
              // Predicated region
              $region63: #{finetuner_classification.1} parent=39 // pred_check
                _
              $region64: #{finetuner_classification.1} parent=39 // pred_check_branch
                %253 = sbr.rel target = $region66
              $region65: #{finetuner_classification.1} parent=39 // pred_region
                _
              $region66: #{finetuner_classification.1} parent=39 // pred_fallthru
                _
            $region40: #{finetuner_classification.1} parent=35 // pred_fallthru
              _
            // Predicated region
            $region41: #{finetuner_classification.1} parent=35 // pred_check
              _
            $region42: #{finetuner_classification.1} parent=35 // pred_check_branch
              %223 = sbr.rel target = $region44
            $region43: #{finetuner_classification.1} parent=35 // pred_region
              %s225 = ssub.s32 256, 1
              loop: start=0, step=1, limit=1
              $region45: #{finetuner_classification.1} parent=43 // loop_pre_header
                _
              $region46: #{finetuner_classification.1} parent=43 // loop_header
                %s227 = sphi 0, %s231
                %p228 = scmp.ge.s32.totalorder %s227, 1
                %s232 = sphi %s217, %s217
                %s233 = sphi %s212, %s212
              $region47: #{finetuner_classification.1} parent=43 // loop_header_branch
                %230 = sbr.rel (%p228) target = $region51
              $region48: #{finetuner_classification.1} parent=43 // loop_body
                %v234 = vld [vmem:[%s232] sm:%s225]
                %235 = vst [vmem:[%s233] sm:%s225] %v234
                %v236 = vld [vmem:[%s232 + $0x18] sm:%s225]
                %237 = vst [vmem:[%s233 + $0x8] sm:%s225] %v236
              $region49: #{finetuner_classification.1} parent=43 // loop_footer
                %s231 = sadd.s32 1, %s227
              $region50: #{finetuner_classification.1} parent=43 // loop_footer_branch
                %226 = sbr.rel target = $region46
              $region51: #{finetuner_classification.1} parent=43 // loop_exit
                _
            $region44: #{finetuner_classification.1} parent=35 // pred_fallthru
              _
          $region36: #{finetuner_classification.1} parent=31 // pred_fallthru
            _
          %254 = vnop
        $region32: #{finetuner_classification.1} parent=27 // pred_fallthru
          _
        // Predicated region
        $region67: #{finetuner_classification.1} parent=27 // pred_check
          %p255 = pneg %p74
        $region68: #{finetuner_classification.1} parent=27 // pred_check_branch
          %257 = sbr.rel (%p255) target = $region70
        $region69: #{finetuner_classification.1} parent=27 // pred_region
          %s258 = sand.u32 %s64, 1
          %s259 = sand.u32 %s64, 1
          %s260 = smul.addr %s259, 16
          %s261 = scalar_lea.vmem [#allocation4], %s260
          %s262 = smul.u32 2, %s19
          %s263 = smul.addr %s262, 3
          %s264 = sadd.s32 %s20, %s263
          %s265 = smul.addr %s264, 8
          %s266 = scalar_lea.vmem %s1, %s265
          // Predicated region
          $region71: #{finetuner_classification.1} parent=69 // pred_check
            _
          $region72: #{finetuner_classification.1} parent=69 // pred_check_branch
            %268 = sbr.rel (0) target = $region74
          $region73: #{finetuner_classification.1} parent=69 // pred_region
            // Predicated region
            $region75: #{finetuner_classification.1} parent=73 // pred_check
              _
            $region76: #{finetuner_classification.1} parent=73 // pred_check_branch
              %270 = sbr.rel (0) target = $region78
            $region77: #{finetuner_classification.1} parent=73 // pred_region
              // Predicated region
              $region90: #{finetuner_classification.1} parent=77 // pred_check
                _
              $region91: #{finetuner_classification.1} parent=77 // pred_check_branch
                %288 = sbr.rel (0) target = $region93
              $region92: #{finetuner_classification.1} parent=77 // pred_region
                loop: start=0, step=1, limit=1
                $region94: #{finetuner_classification.1} parent=92 // loop_pre_header
                  _
                $region95: #{finetuner_classification.1} parent=92 // loop_header
                  %s290 = sphi 0, %s294
                  %p291 = scmp.ge.s32.totalorder %s290, 1
                  %s295 = sphi %s266, %s266
                  %s296 = sphi %s261, %s261
                $region96: #{finetuner_classification.1} parent=92 // loop_header_branch
                  %293 = sbr.rel (%p291) target = $region100
                $region97: #{finetuner_classification.1} parent=92 // loop_body
                  %v297 = vld [vmem:[%s295] sm:$0xff]
                  %298 = vst [vmem:[%s296] sm:$0xff] %v297
                  %v299 = vld [vmem:[%s295 + $0x18] sm:$0xff]
                  %300 = vst [vmem:[%s296 + $0x8] sm:$0xff] %v299
                $region98: #{finetuner_classification.1} parent=92 // loop_footer
                  %s294 = sadd.s32 1, %s290
                $region99: #{finetuner_classification.1} parent=92 // loop_footer_branch
                  %289 = sbr.rel target = $region95
                $region100: #{finetuner_classification.1} parent=92 // loop_exit
                  _
              $region93: #{finetuner_classification.1} parent=77 // pred_fallthru
                _
              // Predicated region
              $region101: #{finetuner_classification.1} parent=77 // pred_check
                _
              $region102: #{finetuner_classification.1} parent=77 // pred_check_branch
                %302 = sbr.rel target = $region104
              $region103: #{finetuner_classification.1} parent=77 // pred_region
                _
              $region104: #{finetuner_classification.1} parent=77 // pred_fallthru
                _
            $region78: #{finetuner_classification.1} parent=73 // pred_fallthru
              _
            // Predicated region
            $region79: #{finetuner_classification.1} parent=73 // pred_check
              _
            $region80: #{finetuner_classification.1} parent=73 // pred_check_branch
              %272 = sbr.rel target = $region82
            $region81: #{finetuner_classification.1} parent=73 // pred_region
              %s274 = ssub.s32 256, 1
              loop: start=0, step=1, limit=1
              $region83: #{finetuner_classification.1} parent=81 // loop_pre_header
                _
              $region84: #{finetuner_classification.1} parent=81 // loop_header
                %s276 = sphi 0, %s280
                %p277 = scmp.ge.s32.totalorder %s276, 1
                %s281 = sphi %s266, %s266
                %s282 = sphi %s261, %s261
              $region85: #{finetuner_classification.1} parent=81 // loop_header_branch
                %279 = sbr.rel (%p277) target = $region89
              $region86: #{finetuner_classification.1} parent=81 // loop_body
                %v283 = vld [vmem:[%s281] sm:%s274]
                %284 = vst [vmem:[%s282] sm:%s274] %v283
                %v285 = vld [vmem:[%s281 + $0x18] sm:%s274]
                %286 = vst [vmem:[%s282 + $0x8] sm:%s274] %v285
              $region87: #{finetuner_classification.1} parent=81 // loop_footer
                %s280 = sadd.s32 1, %s276
              $region88: #{finetuner_classification.1} parent=81 // loop_footer_branch
                %275 = sbr.rel target = $region84
              $region89: #{finetuner_classification.1} parent=81 // loop_exit
                _
            $region82: #{finetuner_classification.1} parent=73 // pred_fallthru
              _
          $region74: #{finetuner_classification.1} parent=69 // pred_fallthru
            _
          %303 = vnop
        $region70: #{finetuner_classification.1} parent=27 // pred_fallthru
          _
      $region28: #{finetuner_classification.1} parent=5 // pred_fallthru
        _
      %p304 = scmp.le.s32.totalorder 1, %s12
      %p305 = scmp.lt.s32.totalorder %s12, 4
      %p306 = pnand %p304, %p305
      %p307 = pneg %p306
      // Predicated region
      $region105: #{finetuner_classification.1} parent=5 // pred_check
        _
      $region106: #{finetuner_classification.1} parent=5 // pred_check_branch
        %309 = sbr.rel (%p306) target = $region108
      $region107: #{finetuner_classification.1} parent=5 // pred_region
        %s310 = ssub.s32 %s12, 1
        %s311 = sand.u32 %s39, 1
        %s312 = sand.u32 %s39, 1
        %s313 = smul.addr %s312, 16
        %s314 = scalar_lea.vmem [#allocation3], %s313
        // Predicated region
        $region109: #{finetuner_classification.1} parent=107 // pred_check
          %p315 = pneg %p52
        $region110: #{finetuner_classification.1} parent=107 // pred_check_branch
          %317 = sbr.rel (%p315) target = $region112
        $region111: #{finetuner_classification.1} parent=107 // pred_region
          _
        $region112: #{finetuner_classification.1} parent=107 // pred_fallthru
          _
        %s318 = sand.u32 %s67, 1
        %s319 = sand.u32 %s67, 1
        %s320 = smul.addr %s319, 16
        %s321 = scalar_lea.vmem [#allocation4], %s320
        // Predicated region
        $region113: #{finetuner_classification.1} parent=107 // pred_check
          %p322 = pneg %p80
        $region114: #{finetuner_classification.1} parent=107 // pred_check_branch
          %324 = sbr.rel (%p322) target = $region116
        $region115: #{finetuner_classification.1} parent=107 // pred_region
          _
        $region116: #{finetuner_classification.1} parent=107 // pred_fallthru
          _
        %s325 = sand.u32 %s39, 1
        %s326 = sand.u32 %s39, 1
        %s327 = smul.addr %s326, 16
        %s328 = scalar_lea.vmem [#allocation3], %s327
        %p329 = pneg %p52
        %p330 = pneg %p49
        %s331 = sand.u32 %s67, 1
        %s332 = sand.u32 %s67, 1
        %s333 = smul.addr %s332, 16
        %s334 = scalar_lea.vmem [#allocation4], %s333
        %p335 = pneg %p80
        %p336 = pneg %p77
        %p337 = scmp.lt.s32.totalorder %s21, 0
        %s338 = scalar_select %p337, %s21, 0
        %s339 = smul.addr %s338, 2
        %s340 = scalar_lea.vmem %s2, %s339
        %p341 = pneg %p106
        %p342 = pneg %p103
        %p343 = pneg %p127
        %p344 = pneg %p124
        %p345 = pneg %p148
        %p346 = pneg %p145
        %p347 = pneg %p174
        %p348 = pneg %p171
        %s349 = smul.u32 2, %s21
        %s350 = smul.u32 2, %s21
        %p351 = scmp.lt.s32.totalorder %s21, 0
        %s352 = scalar_select %p351, %s21, 0
        %s353 = smul.addr %s352, 2
        %s354 = scalar_lea.vmem %s2, %s353
        %p355 = scmp.eq.s32.totalorder %s22, 0
        // Predicated region
        $region117: #{finetuner_classification.1} parent=107 // pred_check
          %p356 = pneg %p355
        $region118: #{finetuner_classification.1} parent=107 // pred_check_branch
          %358 = sbr.rel (%p356) target = $region120
        $region119: #{finetuner_classification.1} parent=107 // pred_region
          %vm359 = vcmask 254976
          %360 = vst.msk [vmem:[#allocation2] sm:$0x3] %vm359, 0.0
        $region120: #{finetuner_classification.1} parent=107 // pred_fallthru
          _
        %v361 = vld [vmem:[%s314] sm:$0xff]
        %v362 = vld [vmem:[%s314 + $0x8] sm:$0xff]
        %v363 = vld [vmem:[%s321] sm:$0xff]
        %v364 = vld [vmem:[%s321 + $0x8] sm:$0xff]
        %366 = vset.pattern.permute.xlu0 0
        %367 = vperm.xlu0 %366, %v363
        %v368 = vpop.permute.xlu0 %367
        %371 = vset.pattern.permute.xlu0 0
        %372 = vperm.xlu0 %371, %v364
        %v373 = vpop.permute.xlu0 %372
        %v375 = vmul.f32 %v361, %v368
        %v376 = vmul.f32 %v362, %v373
        %v377 = vld [vmem:[#allocation2] sm:$0x3]
        %vm378 = vcmask 261120
        %v379 = vsel %vm378, %v375, 0.0
        %v380 = vrot.slane %v379, 4
        %v381 = vadd.f32 %v379, %v380
        %v382 = vrot.slane %v381, 2
        %v383 = vadd.f32 %v381, %v382
        %v384 = vrot.slane %v383, 1
        %v385 = vadd.f32 %v383, %v384
        %v386 = vsel %vm378, %v376, 0.0
        %v387 = vrot.slane %v386, 4
        %v388 = vadd.f32 %v386, %v387
        %v389 = vrot.slane %v388, 2
        %v390 = vadd.f32 %v388, %v389
        %v391 = vrot.slane %v390, 1
        %v392 = vadd.f32 %v390, %v391
        %vm395 = vcmask 1041409
        %v396 = vsel %vm395, %v392, %v385
        %v398 = vadd.f32 %v377, %v396
        %vm399 = vcmask 254976
        %400 = vst.msk [vmem:[#allocation2] sm:$0x3] %vm399, %v398
        %p401 = scmp.eq.s32.totalorder %s22, 2
        // Predicated region
        $region121: #{finetuner_classification.1} parent=107 // pred_check
          %p402 = pneg %p401
        $region122: #{finetuner_classification.1} parent=107 // pred_check_branch
          %404 = sbr.rel (%p402) target = $region124
        $region123: #{finetuner_classification.1} parent=107 // pred_region
          %v405 = vld [vmem:[#allocation2] sm:$0x3]
          %v406 = vld [vmem:[%s354] sm:$0x3]
          %408 = vset.pattern.permute.xlu0 0
          %409 = vperm.xlu0 %408, %v406
          %v410 = vpop.permute.xlu0 %409
          %v412 = vrcp.pop %v410
          %v413 = vmul.f32 %v410, %v412
          %v414 = vsub.f32 1.0, %v413
          %v415 = vmul.f32 %v412, %v414
          %v416 = vadd.f32 %v412, %v415
          %vm417 = vweird.f32 %v410
          %vm418 = vweird.f32 %v412
          %vm419 = vmor %vm417, %vm418
          %v420 = vsel %vm419, %v412, %v416
          %v421 = vand.u32 2147483647, %v410
          %vm422 = vcmp.eq.f32.partialorder %v421, 8.507059e+37
          %v423 = vand.u32 %v410, 2147483648
          %v424 = vor.u32 1.1754944e-38, %v423
          %v425 = vsel %vm422, %v424, %v420
          %v426 = vmul.f32 %v405, %v425
          %v427 = vld [vmem:[%s3] sm:$0xff]
          %v428 = vld [vmem:[%s3 + $0x8] sm:$0xff]
          %v429 = vld [vmem:[%s3 + $0x10] sm:$0xff]
          %v430 = vld [vmem:[%s3 + $0x18] sm:$0xff]
          %v431 = vld [vmem:[%s4] sm:$0x1]
          %v433 = vperm.slane %v431, 0
          %v436 = vsel %vm378, %v426, 0
          %438 = vmatpush.msra.mxu0 0.0
          %439 = vmatpush.msra.mxu0 0.0
          %440 = vmatpush.msra.mxu0 0.0
          %441 = vmatpush.msra.mxu0 0.0
          %442 = vmatpush.msra.mxu0 0.0
          %443 = vmatpush.msra.mxu0 0.0
          %444 = vmatpush.msra.mxu0 0.0
          %445 = vmatpush.msra.mxu0 0.0
          %446 = vmatpush.msra.mxu0 0.0
          %447 = vmatpush.msra.mxu0 0.0
          %448 = vmatpush.msra.mxu0 0.0
          %449 = vmatpush.msra.mxu0 0.0
          %450 = vmatpush.msra.mxu0 %v430
          %451 = vmatpush.msra.mxu0 %v429
          %452 = vmatpush.msra.mxu0 %v428
          %453 = vmatpush.msra.mxu0 %v427
          %454 = vmatmul.f32.gmra.mxu0 %v436
          %v455 = vpop.f32.mrf.mxu0
          %v456 = vadd.f32 %v433, %v455
          %457 = vdwg.mxu0
          %458 = vst [vmem:[#allocation5] sm:$0x3] %v456
        $region124: #{finetuner_classification.1} parent=107 // pred_fallthru
          _
        // Predicated region
        $region125: #{finetuner_classification.1} parent=107 // pred_check
          %p459 = pneg %p171
        $region126: #{finetuner_classification.1} parent=107 // pred_check_branch
          %461 = sbr.rel (%p459) target = $region128
        $region127: #{finetuner_classification.1} parent=107 // pred_region
          %463 = vsyncadd [#allocation6], 0
          %s464 = smul.addr %s21, 2
          %s465 = scalar_lea.hbm %s5, %s464
          %s467 = sshll.u32 [#allocation5], 4
          %s468 = int_to_ptr.vmem [resolvable:$true] %s467
          %s469 = sshll.u32 %s465, 4
          %s470 = int_to_ptr.hbm [resolvable:$true] %s469
          %472 = dma.vmem_to_hbm [thread:$0]  %s468, 32, %s470, [#allocation6]
        $region128: #{finetuner_classification.1} parent=107 // pred_fallthru
          _
        // Predicated region
        $region129: #{finetuner_classification.1} parent=107 // pred_check
          %p473 = pneg %p171
        $region130: #{finetuner_classification.1} parent=107 // pred_check_branch
          %475 = sbr.rel (%p473) target = $region132
        $region131: #{finetuner_classification.1} parent=107 // pred_region
          %477 = dma.done [#allocation6], 32
        $region132: #{finetuner_classification.1} parent=107 // pred_fallthru
          _
      $region108: #{finetuner_classification.1} parent=5 // pred_fallthru
        _
      %p478 = scmp.le.s32.totalorder 2, %s12
      // Predicated region
      $region133: #{finetuner_classification.1} parent=5 // pred_check
        %p479 = pneg %p478
      $region134: #{finetuner_classification.1} parent=5 // pred_check_branch
        %481 = sbr.rel (%p479) target = $region136
      $region135: #{finetuner_classification.1} parent=5 // pred_region
        %s482 = ssub.s32 %s12, 2
      $region136: #{finetuner_classification.1} parent=5 // pred_fallthru
        _
    $region6: #{finetuner_classification.1} parent=1 // loop_footer
      %s16 = sadd.s32 1, %s12
    $region7: #{finetuner_classification.1} parent=1 // loop_footer_branch
      %11 = sbr.rel target = $region3
    $region8: #{finetuner_classification.1} parent=1 // loop_exit
      _
    %483 = vsyncpa [#allocation6], 1
    %s484 = scalar_lea.sflag [#allocation6], 1
    %485 = vsyncpa %s484, 1

</llo_original>
